<compile_context>
chip_gen: v7x
topology: tpu7x:2x2x1
jax: 0.10.0
libtpu: 0.0.40
codegen_flags: <defaults>
</compile_context>

<pallas_src>
import functools
import math

import jax
import jax.numpy as jnp
from jax.experimental import pallas as pl
from jax.experimental.pallas import tpu as pltpu


_VMEM_LIMIT_BYTES = 40 * 1024 * 1024   # raised scoped-VMEM cap (safe on v5e/v6e/v7x)
_FOOTPRINT_BUDGET = 16 * 1024 * 1024   # target double-buffered per-step block bytes


def _sigmoid_f32(g):
    # exact logistic via EUP exp; divide/reciprocal cost is hidden (mem-bound).
    return 1.0 / (1.0 + jnp.exp(-g))


def _glu_kernel_split(a_ref, g_ref, o_ref):
    """Column-tiled path: a_ref = 'out' half tile, g_ref = 'gate' half tile."""
    a = a_ref[...]
    g = g_ref[...]
    if a.dtype != jnp.float32:
        a = a.astype(jnp.float32)
        g = g.astype(jnp.float32)
    o_ref[...] = (a * _sigmoid_f32(g)).astype(o_ref.dtype)


def _glu_kernel_fused(x_ref, o_ref):
    """Narrow-feature fallback: one (tm, 2*half) slab, halves sliced in VMEM."""
    half = o_ref.shape[-1]
    a = x_ref[:, :half]
    g = x_ref[:, half:]
    if a.dtype != jnp.float32:
        a = a.astype(jnp.float32)
        g = g.astype(jnp.float32)
    o_ref[...] = (a * _sigmoid_f32(g)).astype(o_ref.dtype)


def _round_rows(tm, rows, row_align):
    """Clamp/align the row tile: full extent if it covers rows, else aligned."""
    if tm >= rows or rows <= row_align:
        return rows
    return max(row_align, (tm // row_align) * row_align)


def _pick_col_tile(half, max_tc):
    """Largest multiple of 128 that divides `half` (half % 128 == 0), <= max_tc."""
    if half <= max_tc:
        return half
    top = (max_tc // 128) * 128
    for cand in range(top, 127, -128):
        if half % cand == 0:
            return cand
    return 128


@functools.partial(jax.jit, static_argnames=("dim",))
def glu(x, dim=-1):
    """Pallas GLU matching torch: chunk(2, dim) -> out * sigmoid(gate)."""
    ndim = x.ndim
    dim = dim % ndim
    shape = x.shape
    two_c = shape[dim]
    if two_c % 2 != 0:
        raise ValueError("GLU split dim must be even")
    c = two_c // 2

    rows = math.prod(shape[:dim])          # leading axes collapse to rows
    trail = math.prod(shape[dim + 1:])     # trailing axes stay in the lane axis
    half = c * trail                       # elements per row in each half
    # Pure view (no HBM transpose): 'out' = first `half` cols, 'gate' = last.
    x_2d = x.reshape(rows, 2 * half)
    out_shape = shape[:dim] + (c,) + shape[dim + 1:]

    itemsize = jnp.dtype(x.dtype).itemsize
    row_align = max(8, 32 // itemsize)     # f32 -> 8, bf16 -> 16, int8/fp8 -> 32

    if half % 128 == 0:
        # Column-tiled streaming path: 2 input tiles (out/gate) + 1 output tile,
        # each double-buffered -> 6 * tm * tc * itemsize bytes per step.
        elem_budget = max(8 * 128, _FOOTPRINT_BUDGET // (6 * itemsize))
        max_tc = max(128, min(half, elem_budget // 1024, 4096))
        tc = _pick_col_tile(half, max_tc)
        tm = _round_rows(max(row_align, elem_budget // tc), rows, row_align)
        grid = (pl.cdiv(rows, tm), half // tc)
        gate_off = half // tc              # gate half starts at block column offset

        y_2d = pl.pallas_call(
            _glu_kernel_split,
            out_shape=jax.ShapeDtypeStruct((rows, half), x.dtype),
            grid_spec=pltpu.PrefetchScalarGridSpec(
                num_scalar_prefetch=0,
                grid=grid,
                in_specs=[
                    pl.BlockSpec((tm, tc), lambda i, j: (i, j)),             # out half
                    pl.BlockSpec((tm, tc), lambda i, j: (i, j + gate_off)),  # gate half
                ],
                out_specs=pl.BlockSpec((tm, tc), lambda i, j: (i, j)),
            ),
            compiler_params=pltpu.CompilerParams(
                dimension_semantics=("parallel", "parallel"),
                vmem_limit_bytes=_VMEM_LIMIT_BYTES,
            ),
        )(x_2d, x_2d)
    else:
        # Narrow / unaligned feature halves (e.g. half < 128): full-width slab
        # per step, output block equals full output width (lane-exact extents).
        # TODO(synk): very large halves that are not multiples of 128 would need
        # Element-offset column tiling; not needed for this module's shapes.
        tm = _round_rows(
            max(row_align, _FOOTPRINT_BUDGET // (6 * half * itemsize)),
            rows,
            row_align,
        )
        grid = (pl.cdiv(rows, tm),)
        y_2d = pl.pallas_call(
            _glu_kernel_fused,
            out_shape=jax.ShapeDtypeStruct((rows, half), x.dtype),
            grid_spec=pltpu.PrefetchScalarGridSpec(
                num_scalar_prefetch=0,
                grid=grid,
                in_specs=[pl.BlockSpec((tm, 2 * half), lambda i: (i, 0))],
                out_specs=pl.BlockSpec((tm, half), lambda i: (i, 0)),
            ),
            compiler_params=pltpu.CompilerParams(
                dimension_semantics=("parallel",),
                vmem_limit_bytes=_VMEM_LIMIT_BYTES,
            ),
        )(x_2d)

    return y_2d.reshape(out_shape)


def glu_ref(x, dim=-1):
    out, gate = jnp.split(x, 2, axis=dim)
    return out * jax.nn.sigmoid(gate)


if __name__ == "__main__":
    key = jax.random.PRNGKey(0)

    # 1) Conformer-style GLU over the feature (last) dim; half=64 < 128 -> fused path.
    B, T, H = 2, 8, 128
    x = jax.random.normal(key, (B, T, H), dtype=jnp.float32)
    y = glu(x, dim=-1)
    jax.block_until_ready(y)
    assert y.shape == (B, T, H // 2), y.shape
    assert jnp.allclose(y, glu_ref(x, dim=-1), atol=1e-5, rtol=1e-5), "f32 last-dim mismatch"

    # 2) Channel-dim split (NCHW-ish) -> no transpose; half = 4*16*16 = 1024 -> split path.
    x2 = jax.random.normal(jax.random.PRNGKey(1), (2, 8, 16, 16), dtype=jnp.float32)
    y2 = glu(x2, dim=1)
    jax.block_until_ready(y2)
    assert y2.shape == (2, 4, 16, 16), y2.shape
    assert jnp.allclose(y2, glu_ref(x2, dim=1), atol=1e-5, rtol=1e-5), "f32 dim=1 mismatch"

    # 3) bf16 input, f32 in-kernel math, lane-aligned half=128 -> split path.
    x3 = jax.random.normal(jax.random.PRNGKey(2), (2, 8, 256), dtype=jnp.bfloat16)
    y3 = glu(x3, dim=-1)
    jax.block_until_ready(y3)
    y3_ref = glu_ref(x3.astype(jnp.float32), dim=-1)
    assert y3.shape == (2, 8, 128), y3.shape
    assert jnp.allclose(y3.astype(jnp.float32), y3_ref, atol=2e-2, rtol=2e-2), "bf16 mismatch"

    print("KERNEL_OK")
</pallas_src>

<mosaic_0001>
module attributes {stable_mosaic.version = 11 : i64} {
  func.func @_glu_kernel_fused(%arg0: i32, %arg1: memref<16x128xf32, #tpu.memory_space<vmem>>, %arg2: memref<16x64xf32, #tpu.memory_space<vmem>>) attributes {dimension_semantics = [#tpu.dimension_semantics<parallel>], iteration_bounds = array<i64: 1>, scalar_prefetch = 0 : i64, scratch_operands = 0 : i64, tpu.core_type = #tpu.core_type<tc>, window_params = [{transform_indices = @transform_0, window_bounds = array<i64: 16, 128>}, {transform_indices = @transform_1, window_bounds = array<i64: 16, 64>}]} {
    %c0 = arith.constant 0 : index
    %c0_0 = arith.constant 0 : index
    %0 = vector.load %arg1[%c0, %c0_0] : memref<16x128xf32, #tpu.memory_space<vmem>>, vector<16x64xf32>
    %c0_1 = arith.constant 0 : index
    %c64 = arith.constant 64 : index
    %1 = vector.load %arg1[%c0_1, %c64] : memref<16x128xf32, #tpu.memory_space<vmem>>, vector<16x64xf32>
    %cst = arith.constant 0.000000e+00 : f32
    %2 = vector.broadcast %cst : f32 to vector<16x64xf32>
    %3 = arith.subf %2, %1 : vector<16x64xf32>
    %4 = math.exp %3 : vector<16x64xf32>
    %cst_2 = arith.constant 1.000000e+00 : f32
    %5 = vector.broadcast %cst_2 : f32 to vector<16x64xf32>
    %6 = arith.addf %5, %4 : vector<16x64xf32>
    %cst_3 = arith.constant 1.000000e+00 : f32
    %7 = vector.broadcast %cst_3 : f32 to vector<16x64xf32>
    %8 = arith.divf %7, %6 : vector<16x64xf32>
    %9 = arith.mulf %0, %8 : vector<16x64xf32>
    %c0_4 = arith.constant 0 : index
    %c0_5 = arith.constant 0 : index
    %10 = vector.load %arg2[%c0_4, %c0_5] : memref<16x64xf32, #tpu.memory_space<vmem>>, vector<16x64xf32>
    tpu.vector_store %arg2[%c0_4, %c0_5], %9 {strides = array<i32>} : memref<16x64xf32, #tpu.memory_space<vmem>>, vector<16x64xf32>,
    return
  }
  func.func @transform_0(%arg0: i32) -> (i32, i32) {
    %c0_i32 = arith.constant 0 : i32
    %c0_i32_0 = arith.constant 0 : i32
    return %arg0, %c0_i32 : i32, i32
  }
  func.func @transform_1(%arg0: i32) -> (i32, i32) {
    %c0_i32 = arith.constant 0 : i32
    %c0_i32_0 = arith.constant 0 : i32
    return %arg0, %c0_i32 : i32, i32
  }
}

</mosaic_0001>

<llo_original>
// kernel: glu.1
$region0: #{glu.1}
  #allocation0 [shape = 'u32[]', space=smem, size = 0x4, offset = 0x4, fixed_abs, tag = 'smem constant byte address 0x4 - core index']
  #allocation1 [shape = 'u32[144,128]{1,0:T(1,128)}', space=vmem, size = 0x12000, scoped, tag = 'internal scratch']
  %s0 = inlined_call_operand.hbm [shape: f32[16,128], index: 0, kind: input, shape index: {}]
  %s1 = inlined_call_operand.hbm [shape: f32[16,64], index: 1, kind: output, shape index: {}]
  %s2 = sld [smem:[#allocation0]]
  $region18: #{glu.1} parent=0
    _
  %s4 = ssub.s32 1, %s2
  %s5 = scalar_select 0, %s4, %s2
  $region1: #{glu.1} parent=0
    #allocation2 [shape = 'u8[8192]{0}', space=vmem, size = 0x2000, scoped, tag = 'input window, operand 0, single buffered']
    #allocation3 [shape = 's32[1]{0}', space=sflag, size = 0x4, scoped, tag = 'scoped memory for glu.1']
    #allocation4 [shape = 's32[1]{0}', space=sflag, size = 0x4, scoped, tag = 'scoped memory for glu.1']
    #allocation5 [shape = 'u8[8192]{0}', space=vmem, size = 0x2000, scoped, tag = 'output window, operand 0, single buffered']
    %6 = vsyncpa [#allocation3], 0
    %7 = vsyncpa [#allocation4], 0
    // Predicated region
    $region2: #{glu.1} parent=1 // pred_check
      _
    $region3: #{glu.1} parent=1 // pred_check_branch
      %9 = sbr.rel (0) target = $region5
    $region4: #{glu.1} parent=1 // pred_region
      %s11 = ssub.s32 256, 256
      %12 = vsyncadd [#allocation3], %s11
      %s13 = sshll.u32 [#allocation2], 4
      %s14 = int_to_ptr.vmem [resolvable:$true] %s13
      %19 = dma.hbm_to_vmem [thread:$0]  %s0, 256, %s14, [#allocation3], 128, 128, 8
    $region5: #{glu.1} parent=1 // pred_fallthru
      _
    // Predicated region
    $region6: #{glu.1} parent=1 // pred_check
      _
    $region7: #{glu.1} parent=1 // pred_check_branch
      %21 = sbr.rel (0) target = $region9
    $region8: #{glu.1} parent=1 // pred_region
      %22 = dma.done [#allocation3], 256
    $region9: #{glu.1} parent=1 // pred_fallthru
      _
    %v23 = vld [vmem:[#allocation2] sm:$0xff]
    %v24 = vld [vmem:[#allocation2 + $0x8] sm:$0xff]
    %v25 = vsub.f32 0.0, %v23
    %v26 = vsub.f32 0.0, %v24
    %v27 = vmul.f32 %v25, 1.442695
    %v28 = vpow.pop %v27
    %v29 = vmul.f32 %v26, 1.442695
    %v30 = vpow.pop %v29
    %v31 = vadd.f32 %v28, 1.0
    %v32 = vadd.f32 %v30, 1.0
    %v33 = vrcp.pop %v31
    %v34 = vmul.f32 1.0, %v33
    %v35 = vrcp.pop %v32
    %v36 = vmul.f32 1.0, %v35
    %39 = vrot.lane.b32.xlu0 %v34, 64
    %v40 = vpop.permute.xlu0 %39
    %41 = vrot.lane.b32.xlu0 %v36, 64
    %v42 = vpop.permute.xlu0 %41
    %v45 = vmul.f32 %v23, %v40
    %v46 = vmul.f32 %v24, %v42
    %vm47 = vcmask 523264
    %48 = vst.msk [vmem:[#allocation5] sm:$0xff] %vm47, %v45
    %49 = vst.msk [vmem:[#allocation5 + $0x8] sm:$0xff] %vm47, %v46
    // Predicated region
    $region10: #{glu.1} parent=1 // pred_check
      _
    $region11: #{glu.1} parent=1 // pred_check_branch
      %51 = sbr.rel (0) target = $region13
    $region12: #{glu.1} parent=1 // pred_region
      %s53 = ssub.s32 256, 256
      %54 = vsyncadd [#allocation4], %s53
      %s55 = sshll.u32 [#allocation5], 4
      %s56 = int_to_ptr.vmem [resolvable:$true] %s55
      %61 = dma.vmem_to_hbm [thread:$0]  %s56, 256, %s1, [#allocation4], 128, 128, 8
    $region13: #{glu.1} parent=1 // pred_fallthru
      _
    // Predicated region
    $region14: #{glu.1} parent=1 // pred_check
      _
    $region15: #{glu.1} parent=1 // pred_check_branch
      %63 = sbr.rel (0) target = $region17
    $region16: #{glu.1} parent=1 // pred_region
      %64 = dma.done [#allocation4], 256
    $region17: #{glu.1} parent=1 // pred_fallthru
      _
    %65 = vsyncpa [#allocation3], 1
    %66 = vsyncpa [#allocation4], 1

</llo_original>
